<compile_context>
chip_gen: v6e
topology: v6e:2x2x1
jax: 0.10.0
libtpu: 0.0.40
codegen_flags: <defaults>
</compile_context>

<pallas_src>
import jax
import jax.numpy as jnp
from jax.experimental import pallas as pl
from jax.experimental.pallas import tpu as pltpu

_LANES = 1024            # lane-dense width, multiple of 128
_BLOCK_BYTES = 2 << 20   # ~2 MiB / block -> <= 8 MiB with double-buffered in+out
_TINY = 1024             # below this many elements, plain XLA wins over a launch


def _h_sigmoid_kernel(x_ref, o_ref):
    x = x_ref[...].astype(jnp.float32)
    # ReLU6(x + 3) / 6  ==  clamp(x + 3, 0, 6) * (1/6)
    o_ref[...] = (jnp.clip(x + 3.0, 0.0, 6.0) * (1.0 / 6.0)).astype(o_ref.dtype)


def _round_up(a: int, b: int) -> int:
    return ((a + b - 1) // b) * b


def h_sigmoid(x: jax.Array) -> jax.Array:
    """Applies h_sigmoid elementwise. Accepts any shape/dtype (e.g. NCHW)."""
    orig_shape = x.shape
    dtype = x.dtype
    n = x.size
    if n == 0:
        return x
    if n < _TINY:
        # TODO(synk): ideally h_sigmoid is fused into the producer/consumer
        # kernel's epilogue (or left to XLA) instead of a standalone launch.
        return (jnp.clip(x.astype(jnp.float32) + 3.0, 0.0, 6.0) / 6.0).astype(dtype)

    itemsize = jnp.dtype(dtype).itemsize
    flat = x.reshape(-1)

    # Lane-dense retiling: (rows, _LANES), rows padded to a multiple of tm.
    rows_needed = pl.cdiv(n, _LANES)
    tm = max(8, _round_up(_BLOCK_BYTES // (_LANES * itemsize), 8))
    tm = min(tm, _round_up(rows_needed, 8))
    # Ensure >=2 grid steps when there is enough work (keeps both v7x TCs busy).
    if pl.cdiv(rows_needed, tm) == 1 and rows_needed >= 16:
        tm = _round_up(pl.cdiv(rows_needed, 2), 8)

    rows = _round_up(rows_needed, tm)
    padded = rows * _LANES
    if padded != n:
        flat = jnp.pad(flat, (0, padded - n))
    x2 = flat.reshape(rows, _LANES)

    grid = (rows // tm,)

    out = pl.pallas_call(
        _h_sigmoid_kernel,
        out_shape=jax.ShapeDtypeStruct((rows, _LANES), dtype),
        grid=grid,
        in_specs=[pl.BlockSpec((tm, _LANES), lambda i: (i, 0))],
        out_specs=pl.BlockSpec((tm, _LANES), lambda i: (i, 0)),
        compiler_params=pltpu.CompilerParams(
            dimension_semantics=("parallel",)
        ),
    )(x2)

    out_flat = out.reshape(-1)
    if padded != n:
        out_flat = out_flat[:n]
    return out_flat.reshape(orig_shape)


def _ref(x):
    return (jnp.clip(x.astype(jnp.float32) + 3.0, 0.0, 6.0) / 6.0).astype(x.dtype)


if __name__ == "__main__":
    key = jax.random.PRNGKey(0)
    k1, k2 = jax.random.split(key)

    # NCHW input, same convention as the PyTorch module.
    x = jax.random.normal(k1, (2, 4, 16, 16), dtype=jnp.float32) * 4.0
    y = jax.block_until_ready(h_sigmoid(x))
    assert y.shape == x.shape and y.dtype == x.dtype
    assert jnp.allclose(y, _ref(x), atol=1e-6), "f32 mismatch vs reference"

    # Larger bf16 map: exercises padding, multi-step grid, and bf16 HBM traffic.
    xb = (jax.random.normal(k2, (2, 8, 56, 56), dtype=jnp.float32) * 4.0).astype(
        jnp.bfloat16
    )
    yb = jax.block_until_ready(h_sigmoid(xb))
    assert yb.shape == xb.shape and yb.dtype == xb.dtype
    assert jnp.allclose(
        yb.astype(jnp.float32), _ref(xb).astype(jnp.float32), atol=1e-2
    ), "bf16 mismatch vs reference"

    print("KERNEL_OK")
</pallas_src>

<mosaic_0001>
module attributes {stable_mosaic.version = 11 : i64} {
  func.func @_h_sigmoid_kernel(%arg0: i32, %arg1: memref<8x1024xf32, #tpu.memory_space<vmem>>, %arg2: memref<8x1024xf32, #tpu.memory_space<vmem>>) attributes {dimension_semantics = [#tpu.dimension_semantics<parallel>], iteration_bounds = array<i64: 1>, scalar_prefetch = 0 : i64, scratch_operands = 0 : i64, tpu.core_type = #tpu.core_type<tc>, window_params = [{transform_indices = @transform_0, window_bounds = array<i64: 8, 1024>}, {transform_indices = @transform_1, window_bounds = array<i64: 8, 1024>}]} {
    %c0 = arith.constant 0 : index
    %c0_0 = arith.constant 0 : index
    %0 = vector.load %arg1[%c0, %c0_0] : memref<8x1024xf32, #tpu.memory_space<vmem>>, vector<8x1024xf32>
    %cst = arith.constant 3.000000e+00 : f32
    %1 = vector.broadcast %cst : f32 to vector<8x1024xf32>
    %2 = arith.addf %0, %1 : vector<8x1024xf32>
    %cst_1 = arith.constant 0.000000e+00 : f32
    %cst_2 = arith.constant 6.000000e+00 : f32
    %3 = vector.broadcast %cst_1 : f32 to vector<8x1024xf32>
    %4 = arith.maximumf %3, %2 : vector<8x1024xf32>
    %5 = vector.broadcast %cst_2 : f32 to vector<8x1024xf32>
    %6 = arith.minimumf %5, %4 : vector<8x1024xf32>
    %cst_3 = arith.constant 0.166666672 : f32
    %7 = vector.broadcast %cst_3 : f32 to vector<8x1024xf32>
    %8 = arith.mulf %6, %7 : vector<8x1024xf32>
    %c0_4 = arith.constant 0 : index
    %c0_5 = arith.constant 0 : index
    %9 = vector.load %arg2[%c0_4, %c0_5] : memref<8x1024xf32, #tpu.memory_space<vmem>>, vector<8x1024xf32>
    tpu.vector_store %arg2[%c0_4, %c0_5], %8 {strides = array<i32>} : memref<8x1024xf32, #tpu.memory_space<vmem>>, vector<8x1024xf32>,
    return
  }
  func.func @transform_0(%arg0: i32) -> (i32, i32) {
    %c0_i32 = arith.constant 0 : i32
    %c0_i32_0 = arith.constant 0 : i32
    return %arg0, %c0_i32 : i32, i32
  }
  func.func @transform_1(%arg0: i32) -> (i32, i32) {
    %c0_i32 = arith.constant 0 : i32
    %c0_i32_0 = arith.constant 0 : i32
    return %arg0, %c0_i32 : i32, i32
  }
}

</mosaic_0001>

<llo_original>
// kernel: tpu_custom_call.1
$region0: #{tpu_custom_call.1}
  #allocation0 [shape = 'u32[]', space=smem, size = 0x4, offset = 0x4, fixed_abs, tag = 'smem constant byte address 0x4 - core index']
  #allocation1 [shape = 'u32[144,128]{1,0:T(1,128)}', space=vmem, size = 0x12000, scoped, tag = 'internal scratch']
  %s0 = inlined_call_operand.hbm [shape: f32[8,1024], index: 0, kind: input, shape index: {}]
  %s1 = inlined_call_operand.hbm [shape: f32[8,1024], index: 1, kind: output, shape index: {}]
  %s2 = sld [smem:[#allocation0]]
  $region18: #{tpu_custom_call.1} parent=0
    _
  %s4 = ssub.s32 1, %s2
  %s5 = scalar_select 0, %s4, %s2
  $region1: #{tpu_custom_call.1} parent=0
    #allocation2 [shape = 'u8[32768]{0}', space=vmem, size = 0x8000, scoped, tag = 'input window, operand 0, single buffered']
    #allocation3 [shape = 's32[1]{0}', space=sflag, size = 0x4, scoped, tag = 'scoped memory for tpu_custom_call.1']
    #allocation4 [shape = 's32[1]{0}', space=sflag, size = 0x4, scoped, tag = 'scoped memory for tpu_custom_call.1']
    #allocation5 [shape = 'u8[32768]{0}', space=vmem, size = 0x8000, scoped, tag = 'output window, operand 0, single buffered']
    %6 = vsyncpa [#allocation3], 0
    %7 = vsyncpa [#allocation4], 0
    // Predicated region
    $region2: #{tpu_custom_call.1} parent=1 // pred_check
      _
    $region3: #{tpu_custom_call.1} parent=1 // pred_check_branch
      %9 = sbr.rel (0) target = $region5
    $region4: #{tpu_custom_call.1} parent=1 // pred_region
      %s11 = ssub.s32 1024, 1024
      %12 = vsyncadd [#allocation3], %s11
      %s14 = sshll.u32 [#allocation2], 4
      %s15 = int_to_ptr.vmem [resolvable:$true] %s14
      %17 = dma.hbm_to_vmem [thread:$0]  %s0, 1024, %s15, [#allocation3]
    $region5: #{tpu_custom_call.1} parent=1 // pred_fallthru
      _
    // Predicated region
    $region6: #{tpu_custom_call.1} parent=1 // pred_check
      _
    $region7: #{tpu_custom_call.1} parent=1 // pred_check_branch
      %19 = sbr.rel (0) target = $region9
    $region8: #{tpu_custom_call.1} parent=1 // pred_region
      %20 = dma.done [#allocation3], 1024
    $region9: #{tpu_custom_call.1} parent=1 // pred_fallthru
      _
    %v21 = vld [vmem:[#allocation2] sm:$0xff]
    %v22 = vld [vmem:[#allocation2 + $0x8] sm:$0xff]
    %v23 = vld [vmem:[#allocation2 + $0x10] sm:$0xff]
    %v24 = vld [vmem:[#allocation2 + $0x18] sm:$0xff]
    %v25 = vld [vmem:[#allocation2 + $0x20] sm:$0xff]
    %v26 = vld [vmem:[#allocation2 + $0x28] sm:$0xff]
    %v27 = vld [vmem:[#allocation2 + $0x30] sm:$0xff]
    %v28 = vld [vmem:[#allocation2 + $0x38] sm:$0xff]
    %v29 = vadd.f32 %v21, 3.0
    %v30 = vadd.f32 %v22, 3.0
    %v31 = vadd.f32 %v23, 3.0
    %v32 = vadd.f32 %v24, 3.0
    %v33 = vadd.f32 %v25, 3.0
    %v34 = vadd.f32 %v26, 3.0
    %v35 = vadd.f32 %v27, 3.0
    %v36 = vadd.f32 %v28, 3.0
    %v37 = vmax.f32 %v29, 0.0
    %v38 = vmax.f32 %v30, 0.0
    %v39 = vmax.f32 %v31, 0.0
    %v40 = vmax.f32 %v32, 0.0
    %v41 = vmax.f32 %v33, 0.0
    %v42 = vmax.f32 %v34, 0.0
    %v43 = vmax.f32 %v35, 0.0
    %v44 = vmax.f32 %v36, 0.0
    %v45 = vmin.f32 %v37, 6.0
    %v46 = vmin.f32 %v38, 6.0
    %v47 = vmin.f32 %v39, 6.0
    %v48 = vmin.f32 %v40, 6.0
    %v49 = vmin.f32 %v41, 6.0
    %v50 = vmin.f32 %v42, 6.0
    %v51 = vmin.f32 %v43, 6.0
    %v52 = vmin.f32 %v44, 6.0
    %v53 = vmul.f32 %v45, 0.16666667
    %v54 = vmul.f32 %v46, 0.16666667
    %v55 = vmul.f32 %v47, 0.16666667
    %v56 = vmul.f32 %v48, 0.16666667
    %v57 = vmul.f32 %v49, 0.16666667
    %v58 = vmul.f32 %v50, 0.16666667
    %v59 = vmul.f32 %v51, 0.16666667
    %v60 = vmul.f32 %v52, 0.16666667
    %61 = vst [vmem:[#allocation5] sm:$0xff] %v53
    %62 = vst [vmem:[#allocation5 + $0x8] sm:$0xff] %v54
    %63 = vst [vmem:[#allocation5 + $0x10] sm:$0xff] %v55
    %64 = vst [vmem:[#allocation5 + $0x18] sm:$0xff] %v56
    %65 = vst [vmem:[#allocation5 + $0x20] sm:$0xff] %v57
    %66 = vst [vmem:[#allocation5 + $0x28] sm:$0xff] %v58
    %67 = vst [vmem:[#allocation5 + $0x30] sm:$0xff] %v59
    %68 = vst [vmem:[#allocation5 + $0x38] sm:$0xff] %v60
    // Predicated region
    $region10: #{tpu_custom_call.1} parent=1 // pred_check
      _
    $region11: #{tpu_custom_call.1} parent=1 // pred_check_branch
      %70 = sbr.rel (0) target = $region13
    $region12: #{tpu_custom_call.1} parent=1 // pred_region
      %s72 = ssub.s32 1024, 1024
      %73 = vsyncadd [#allocation4], %s72
      %s75 = sshll.u32 [#allocation5], 4
      %s76 = int_to_ptr.vmem [resolvable:$true] %s75
      %78 = dma.vmem_to_hbm [thread:$0]  %s76, 1024, %s1, [#allocation4]
    $region13: #{tpu_custom_call.1} parent=1 // pred_fallthru
      _
    // Predicated region
    $region14: #{tpu_custom_call.1} parent=1 // pred_check
      _
    $region15: #{tpu_custom_call.1} parent=1 // pred_check_branch
      %80 = sbr.rel (0) target = $region17
    $region16: #{tpu_custom_call.1} parent=1 // pred_region
      %81 = dma.done [#allocation4], 1024
    $region17: #{tpu_custom_call.1} parent=1 // pred_fallthru
      _
    %82 = vsyncpa [#allocation3], 1
    %83 = vsyncpa [#allocation4], 1

</llo_original>
